<compile_context>
chip_gen: v7x
topology: tpu7x:2x2x1
jax: 0.10.0
libtpu: 0.0.40
codegen_flags: <defaults>
</compile_context>

<pallas_src>
import functools

import jax
import jax.numpy as jnp
from jax.experimental import pallas as pl
from jax.experimental.pallas import tpu as pltpu


def _bce_rowmean_kernel(x_ref, t_ref, m_ref, o_ref, *, inv_len):
    k = pl.program_id(1)

    # Output block is resident across the reduction (seq) axis -> use it as the
    # f32 accumulator.
    @pl.when(k == 0)
    def _init():
        o_ref[...] = jnp.zeros_like(o_ref)

    # All compute in f32 (matches the .float() casts in the PyTorch forward).
    x = x_ref[...].astype(jnp.float32)
    t = t_ref[...].astype(jnp.float32)
    w = m_ref[...].astype(jnp.float32)

    # Numerically-stable binary_cross_entropy_with_logits (reduction='none'):
    #   loss = max(x, 0) - x*t + log1p(exp(-|x|)),  weighted elementwise by mask.
    loss = jnp.maximum(x, 0.0) - x * t + jnp.log1p(jnp.exp(-jnp.abs(x)))
    o_ref[...] += jnp.sum(w * loss, axis=1, keepdims=True)

    # Finalize: divide the running sum by the FULL sequence length (PyTorch
    # .mean(dim=1) divides by L, including masked-out positions).
    @pl.when(k == pl.num_programs(1) - 1)
    def _finalize():
        o_ref[...] = o_ref[...] * inv_len


def _pick_tile(n, target, align):
    """Largest divisor of n that is a multiple of `align` and <= target.

    Falls back to the full dimension n if n is not a multiple of `align`
    (a full-extent block is always a legal BlockSpec dimension).
    """
    if n % align != 0:
        return n
    t = max(align, min(target, n))
    t -= t % align
    for cand in range(t, 0, -align):
        if n % cand == 0:
            return cand
    return n


def sigmoid_bin_ce_loss(inputs, targets, mask, *, batch_tile=None, l_tile=None):
    B, L = inputs.shape
    assert targets.shape == (B, L) and mask.shape == (B, L)

    if batch_tile is None:
        batch_tile = _pick_tile(B, 256, 8)      # ~256 rows per tile when possible
    if l_tile is None:
        l_tile = _pick_tile(L, 2048, 128)       # ~2048 lanes per tile when possible
    assert B % batch_tile == 0 and L % l_tile == 0

    grid = (B // batch_tile, L // l_tile)

    # VMEM budget: 3 inputs x 2 pipeline buffers x block + resident output.
    in_bytes = sum(
        batch_tile * l_tile * jnp.dtype(a.dtype).itemsize
        for a in (inputs, targets, mask)
    )
    needed = 2 * in_bytes + 2 * batch_tile * 4
    vmem_limit = int(min(max(needed + (8 << 20), 32 << 20), 64 << 20))

    kernel = functools.partial(_bce_rowmean_kernel, inv_len=float(1.0 / L))

    out = pl.pallas_call(
        kernel,
        out_shape=jax.ShapeDtypeStruct((B, 1), jnp.float32),
        grid_spec=pltpu.PrefetchScalarGridSpec(
            num_scalar_prefetch=0,
            grid=grid,
            in_specs=[
                pl.BlockSpec((batch_tile, l_tile), lambda i, k: (i, k)),
                pl.BlockSpec((batch_tile, l_tile), lambda i, k: (i, k)),
                pl.BlockSpec((batch_tile, l_tile), lambda i, k: (i, k)),
            ],
            out_specs=pl.BlockSpec((batch_tile, 1), lambda i, k: (i, 0)),
        ),
        compiler_params=pltpu.CompilerParams(
            dimension_semantics=("parallel", "arbitrary"),
            vmem_limit_bytes=vmem_limit,
        ),
    )(inputs, targets, mask)

    return out[:, 0]  # (B,)


def _reference(inputs, targets, mask):
    x = inputs.astype(jnp.float32)
    t = targets.astype(jnp.float32)
    w = mask.astype(jnp.float32)
    loss = jnp.maximum(x, 0.0) - x * t + jnp.log1p(jnp.exp(-jnp.abs(x)))
    return jnp.mean(w * loss, axis=1)


if __name__ == "__main__":
    key = jax.random.PRNGKey(0)

    # Test 1: f32 inputs, forced small tiles so the seq-reduction grid axis has
    # multiple steps (exercises the accumulator init / accumulate / finalize path).
    k1, k2, k3, key = *jax.random.split(key, 3), jax.random.split(key, 4)[-1]
    B, L = 8, 512
    inputs = jax.random.normal(k1, (B, L), dtype=jnp.float32) * 3.0
    targets = (jax.random.uniform(k2, (B, L)) > 0.5).astype(jnp.float32)
    mask = (jax.random.uniform(k3, (B, L)) > 0.25).astype(jnp.float32)

    out = sigmoid_bin_ce_loss(inputs, targets, mask, batch_tile=8, l_tile=128)
    out = jax.block_until_ready(out)
    ref = _reference(inputs, targets, mask)
    assert out.shape == (B,)
    assert jnp.allclose(out, ref, atol=1e-5, rtol=1e-5), (out, ref)

    # Test 2: bf16 inputs/targets (narrower HBM reads), default tile selection.
    k1, k2, k3, key = *jax.random.split(key, 3), jax.random.split(key, 4)[-1]
    B2, L2 = 16, 256
    inputs2 = (jax.random.normal(k1, (B2, L2), dtype=jnp.float32) * 3.0).astype(jnp.bfloat16)
    targets2 = (jax.random.uniform(k2, (B2, L2)) > 0.5).astype(jnp.bfloat16)
    mask2 = (jax.random.uniform(k3, (B2, L2)) > 0.25).astype(jnp.float32)

    out2 = jax.block_until_ready(sigmoid_bin_ce_loss(inputs2, targets2, mask2))
    ref2 = _reference(inputs2, targets2, mask2)
    assert out2.shape == (B2,)
    assert jnp.allclose(out2, ref2, atol=1e-5, rtol=1e-5), (out2, ref2)

    # Test 3: batch not a multiple of 8 -> full-extent batch block fallback.
    k1, k2, k3, _ = jax.random.split(key, 4)
    B3, L3 = 6, 128
    inputs3 = jax.random.normal(k1, (B3, L3), dtype=jnp.float32) * 3.0
    targets3 = (jax.random.uniform(k2, (B3, L3)) > 0.5).astype(jnp.float32)
    mask3 = (jax.random.uniform(k3, (B3, L3)) > 0.25).astype(jnp.float32)

    out3 = jax.block_until_ready(sigmoid_bin_ce_loss(inputs3, targets3, mask3))
    ref3 = _reference(inputs3, targets3, mask3)
    assert out3.shape == (B3,)
    assert jnp.allclose(out3, ref3, atol=1e-5, rtol=1e-5), (out3, ref3)

    print("KERNEL_OK")
</pallas_src>

<mosaic_0001>
module attributes {stable_mosaic.version = 11 : i64} {
  func.func @_bce_rowmean_kernel(%arg0: i32, %arg1: i32, %arg2: memref<8x128xf32, #tpu.memory_space<vmem>>, %arg3: memref<8x128xf32, #tpu.memory_space<vmem>>, %arg4: memref<8x128xf32, #tpu.memory_space<vmem>>, %arg5: memref<8x1xf32, #tpu.memory_space<vmem>>) attributes {dimension_semantics = [#tpu.dimension_semantics<parallel>, #tpu.dimension_semantics<arbitrary>], iteration_bounds = array<i64: 1, 4>, scalar_prefetch = 0 : i64, scratch_operands = 0 : i64, tpu.core_type = #tpu.core_type<tc>, window_params = [{transform_indices = @transform_0, window_bounds = array<i64: 8, 128>}, {transform_indices = @transform_1, window_bounds = array<i64: 8, 128>}, {transform_indices = @transform_2, window_bounds = array<i64: 8, 128>}, {transform_indices = @transform_3, window_bounds = array<i64: 8, 1>}]} {
    %c0_i32 = arith.constant 0 : i32
    %0 = arith.cmpi eq, %arg1, %c0_i32 : i32
    %1 = arith.extui %0 : i1 to i32
    %c0_i32_0 = arith.constant 0 : i32
    %2 = arith.cmpi ne, %1, %c0_i32_0 : i32
    scf.if %2 {
      %cst_13 = arith.constant 0.000000e+00 : f32
      %25 = vector.broadcast %cst_13 : f32 to vector<8x1xf32>
      %c0_14 = arith.constant 0 : index
      %c0_15 = arith.constant 0 : index
      %26 = vector.load %arg5[%c0_14, %c0_15] : memref<8x1xf32, #tpu.memory_space<vmem>>, vector<8x1xf32>
      tpu.vector_store %arg5[%c0_14, %c0_15], %25 {strides = array<i32>} : memref<8x1xf32, #tpu.memory_space<vmem>>, vector<8x1xf32>,
    } else {
    }
    %c0 = arith.constant 0 : index
    %c0_1 = arith.constant 0 : index
    %3 = vector.load %arg2[%c0, %c0_1] : memref<8x128xf32, #tpu.memory_space<vmem>>, vector<8x128xf32>
    %c0_2 = arith.constant 0 : index
    %c0_3 = arith.constant 0 : index
    %4 = vector.load %arg3[%c0_2, %c0_3] : memref<8x128xf32, #tpu.memory_space<vmem>>, vector<8x128xf32>
    %c0_4 = arith.constant 0 : index
    %c0_5 = arith.constant 0 : index
    %5 = vector.load %arg4[%c0_4, %c0_5] : memref<8x128xf32, #tpu.memory_space<vmem>>, vector<8x128xf32>
    %cst = arith.constant 0.000000e+00 : f32
    %6 = vector.broadcast %cst : f32 to vector<8x128xf32>
    %7 = arith.maximumf %3, %6 : vector<8x128xf32>
    %8 = arith.mulf %3, %4 : vector<8x128xf32>
    %9 = arith.subf %7, %8 : vector<8x128xf32>
    %10 = math.absf %3 : vector<8x128xf32>
    %cst_6 = arith.constant 0.000000e+00 : f32
    %11 = vector.broadcast %cst_6 : f32 to vector<8x128xf32>
    %12 = arith.subf %11, %10 : vector<8x128xf32>
    %13 = math.exp %12 : vector<8x128xf32>
    %14 = math.log1p %13 : vector<8x128xf32>
    %15 = arith.addf %9, %14 : vector<8x128xf32>
    %c0_7 = arith.constant 0 : index
    %c0_8 = arith.constant 0 : index
    %16 = vector.load %arg5[%c0_7, %c0_8] : memref<8x1xf32, #tpu.memory_space<vmem>>, vector<8x1xf32>
    %17 = arith.mulf %5, %15 : vector<8x128xf32>
    %cst_9 = arith.constant dense<0.000000e+00> : vector<8xf32>
    %18 = vector.multi_reduction <add>, %17, %cst_9 [1] : vector<8x128xf32> to vector<8xf32>
    %19 = vector.shape_cast %18 : vector<8xf32> to vector<8x1xf32>
    %20 = arith.addf %16, %19 : vector<8x1xf32>
    %c0_10 = arith.constant 0 : index
    %c0_11 = arith.constant 0 : index
    %21 = vector.load %arg5[%c0_10, %c0_11] : memref<8x1xf32, #tpu.memory_space<vmem>>, vector<8x1xf32>
    tpu.vector_store %arg5[%c0_10, %c0_11], %20 {strides = array<i32>} : memref<8x1xf32, #tpu.memory_space<vmem>>, vector<8x1xf32>,
    %c3_i32 = arith.constant 3 : i32
    %22 = arith.cmpi eq, %arg1, %c3_i32 : i32
    %23 = arith.extui %22 : i1 to i32
    %c0_i32_12 = arith.constant 0 : i32
    %24 = arith.cmpi ne, %23, %c0_i32_12 : i32
    scf.if %24 {
      %c0_13 = arith.constant 0 : index
      %c0_14 = arith.constant 0 : index
      %25 = vector.load %arg5[%c0_13, %c0_14] : memref<8x1xf32, #tpu.memory_space<vmem>>, vector<8x1xf32>
      %cst_15 = arith.constant 0.001953125 : f32
      %26 = vector.broadcast %cst_15 : f32 to vector<8x1xf32>
      %27 = arith.mulf %25, %26 : vector<8x1xf32>
      %c0_16 = arith.constant 0 : index
      %c0_17 = arith.constant 0 : index
      %28 = vector.load %arg5[%c0_16, %c0_17] : memref<8x1xf32, #tpu.memory_space<vmem>>, vector<8x1xf32>
      tpu.vector_store %arg5[%c0_16, %c0_17], %27 {strides = array<i32>} : memref<8x1xf32, #tpu.memory_space<vmem>>, vector<8x1xf32>,
    } else {
    }
    return
  }
  func.func @transform_0(%arg0: i32, %arg1: i32) -> (i32, i32) {
    %c0_i32 = arith.constant 0 : i32
    return %arg0, %arg1 : i32, i32
  }
  func.func @transform_1(%arg0: i32, %arg1: i32) -> (i32, i32) {
    %c0_i32 = arith.constant 0 : i32
    return %arg0, %arg1 : i32, i32
  }
  func.func @transform_2(%arg0: i32, %arg1: i32) -> (i32, i32) {
    %c0_i32 = arith.constant 0 : i32
    return %arg0, %arg1 : i32, i32
  }
  func.func @transform_3(%arg0: i32, %arg1: i32) -> (i32, i32) {
    %c0_i32 = arith.constant 0 : i32
    %c0_i32_0 = arith.constant 0 : i32
    return %arg0, %c0_i32 : i32, i32
  }
}

</mosaic_0001>

<llo_original>
// kernel: tpu_custom_call.1
$region0: #{tpu_custom_call.1}
  #allocation0 [shape = 'u32[]', space=smem, size = 0x4, offset = 0x4, fixed_abs, tag = 'smem constant byte address 0x4 - core index']
  #allocation1 [shape = 'u32[144,128]{1,0:T(1,128)}', space=vmem, size = 0x12000, scoped, tag = 'internal scratch']
  %s0 = inlined_call_operand.hbm [shape: f32[8,512], index: 0, kind: input, shape index: {}]
  %s1 = inlined_call_operand.hbm [shape: f32[8,512], index: 1, kind: input, shape index: {}]
  %s2 = inlined_call_operand.hbm [shape: f32[8,512], index: 2, kind: input, shape index: {}]
  %s3 = inlined_call_operand.vmem [shape: f32[8,1], index: 3, kind: output, shape index: {}]
  %s4 = sld [smem:[#allocation0]]
  $region65: #{tpu_custom_call.1} parent=0
    _
  %s6 = ssub.s32 1, %s4
  %s7 = scalar_select 0, %s6, %s4
  $region1: #{tpu_custom_call.1} parent=0
    #allocation2 [shape = 'u8[8192]{0}', space=vmem, size = 0x2000, scoped, tag = 'input window, operand 0']
    #allocation3 [shape = 's32[2]{0}', space=sflag, size = 0x8, scoped, tag = 'scoped memory for tpu_custom_call.1']
    #allocation4 [shape = 'u8[8192]{0}', space=vmem, size = 0x2000, scoped, tag = 'input window, operand 1']
    #allocation5 [shape = 's32[2]{0}', space=sflag, size = 0x8, scoped, tag = 'scoped memory for tpu_custom_call.1']
    #allocation6 [shape = 'u8[8192]{0}', space=vmem, size = 0x2000, scoped, tag = 'input window, operand 2']
    %8 = vsyncpa [#allocation3], 0
    %s9 = scalar_lea.sflag [#allocation3], 1
    %10 = vsyncpa %s9, 0
    %11 = vsyncpa [#allocation5], 0
    %s12 = scalar_lea.sflag [#allocation5], 1
    %13 = vsyncpa %s12, 0
    loop: start=0, step=1, limit=6
    $region2: #{tpu_custom_call.1} parent=1 // loop_pre_header
      _
    $region3: #{tpu_custom_call.1} parent=1 // loop_header
      %s15 = sphi 0, %s19
      %p16 = scmp.ge.s32.totalorder %s15, 6
      %s22 = sphi 0, %s34
      %s23 = sphi 0, %s30
      %s24 = sphi 0, %s22
      %s25 = sphi 0, %s23
      %s26 = sphi 0, %s24
      %s27 = sphi 0, %s25
      %s39 = sphi 0, %s41
      %s42 = sphi 0, %s39
      %s43 = sphi 0, %s42
      %s59 = sphi 0, %s43
      %s67 = sphi 0, %s69
      %s70 = sphi 0, %s67
      %s71 = sphi 0, %s70
      %s87 = sphi 0, %s71
      %s95 = sphi 0, %s97
      %s98 = sphi 0, %s95
      %s99 = sphi 0, %s98
      %s115 = sphi 0, %s99
      %s121 = sphi 0, %s123
      %s124 = sphi 0, %s121
      %s125 = sphi 0, %s124
      %s141 = sphi 0, %s125
    $region4: #{tpu_custom_call.1} parent=1 // loop_header_branch
      %18 = sbr.rel (%p16) target = $region8
    $region5: #{tpu_custom_call.1} parent=1 // loop_body
      %s20 = ssub.s32 %s15, 1
      %s21 = ssub.s32 %s15, 2
      %s28 = sadd.s32 1, %s23
      %p29 = scmp.ge.s32.totalorder %s28, 4
      %s30 = scalar_select %p29, 0, %s28
      %s31 = sadd.s32 1, %s22
      %s32 = scalar_select %p29, %s31, %s22
      %p33 = scmp.ge.s32.totalorder %s32, 1
      %s34 = scalar_select %p33, 0, %s32
      %s35 = ssub.s32 %s22, %s34
      %s36 = ssub.s32 %s23, %s30
      %s37 = sor.u32 %s35, %s36
      %p38 = scmp.eq.s32.totalorder %s37, 0
      %s40 = sadd.s32 %s39, 1
      %s41 = scalar_select %p38, %s39, %s40
      %p44 = pneg %p38
      %p45 = scmp.eq.s32.totalorder %s15, 3
      %p46 = por %p44, %p45
      %p47 = scmp.ne.s32.totalorder %s39, %s42
      %p48 = scmp.eq.s32.totalorder %s15, 0
      %p49 = por %p47, %p48
      %p50 = scmp.ne.s32.totalorder %s39, %s42
      %p51 = scmp.eq.s32.totalorder %s20, 3
      %p52 = por %p50, %p51
      %p53 = scmp.ne.s32.totalorder %s42, %s43
      %p54 = scmp.eq.s32.totalorder %s20, 0
      %p55 = por %p53, %p54
      %p56 = scmp.ne.s32.totalorder %s42, %s43
      %p57 = scmp.eq.s32.totalorder %s21, 3
      %p58 = por %p56, %p57
      %p60 = scmp.ne.s32.totalorder %s43, %s59
      %p61 = scmp.eq.s32.totalorder %s21, 0
      %p62 = por %p60, %p61
      %s63 = ssub.s32 %s22, %s34
      %s64 = ssub.s32 %s23, %s30
      %s65 = sor.u32 %s63, %s64
      %p66 = scmp.eq.s32.totalorder %s65, 0
      %s68 = sadd.s32 %s67, 1
      %s69 = scalar_select %p66, %s67, %s68
      %p72 = pneg %p66
      %p73 = scmp.eq.s32.totalorder %s15, 3
      %p74 = por %p72, %p73
      %p75 = scmp.ne.s32.totalorder %s67, %s70
      %p76 = scmp.eq.s32.totalorder %s15, 0
      %p77 = por %p75, %p76
      %p78 = scmp.ne.s32.totalorder %s67, %s70
      %p79 = scmp.eq.s32.totalorder %s20, 3
      %p80 = por %p78, %p79
      %p81 = scmp.ne.s32.totalorder %s70, %s71
      %p82 = scmp.eq.s32.totalorder %s20, 0
      %p83 = por %p81, %p82
      %p84 = scmp.ne.s32.totalorder %s70, %s71
      %p85 = scmp.eq.s32.totalorder %s21, 3
      %p86 = por %p84, %p85
      %p88 = scmp.ne.s32.totalorder %s71, %s87
      %p89 = scmp.eq.s32.totalorder %s21, 0
      %p90 = por %p88, %p89
      %s91 = ssub.s32 %s22, %s34
      %s92 = ssub.s32 %s23, %s30
      %s93 = sor.u32 %s91, %s92
      %p94 = scmp.eq.s32.totalorder %s93, 0
      %s96 = sadd.s32 %s95, 1
      %s97 = scalar_select %p94, %s95, %s96
      %p100 = pneg %p94
      %p101 = scmp.eq.s32.totalorder %s15, 3
      %p102 = por %p100, %p101
      %p103 = scmp.ne.s32.totalorder %s95, %s98
      %p104 = scmp.eq.s32.totalorder %s15, 0
      %p105 = por %p103, %p104
      %p106 = scmp.ne.s32.totalorder %s95, %s98
      %p107 = scmp.eq.s32.totalorder %s20, 3
      %p108 = por %p106, %p107
      %p109 = scmp.ne.s32.totalorder %s98, %s99
      %p110 = scmp.eq.s32.totalorder %s20, 0
      %p111 = por %p109, %p110
      %p112 = scmp.ne.s32.totalorder %s98, %s99
      %p113 = scmp.eq.s32.totalorder %s21, 3
      %p114 = por %p112, %p113
      %p116 = scmp.ne.s32.totalorder %s99, %s115
      %p117 = scmp.eq.s32.totalorder %s21, 0
      %p118 = por %p116, %p117
      %s119 = ssub.s32 %s22, %s34
      %p120 = scmp.eq.s32.totalorder %s119, 0
      %s122 = sadd.s32 %s121, 1
      %s123 = scalar_select %p120, %s121, %s122
      %p126 = pneg %p120
      %p127 = scmp.eq.s32.totalorder %s15, 3
      %p128 = por %p126, %p127
      %p129 = scmp.ne.s32.totalorder %s121, %s124
      %p130 = scmp.eq.s32.totalorder %s15, 0
      %p131 = por %p129, %p130
      %p132 = scmp.ne.s32.totalorder %s121, %s124
      %p133 = scmp.eq.s32.totalorder %s20, 3
      %p134 = por %p132, %p133
      %p135 = scmp.ne.s32.totalorder %s124, %s125
      %p136 = scmp.eq.s32.totalorder %s20, 0
      %p137 = por %p135, %p136
      %p138 = scmp.ne.s32.totalorder %s124, %s125
      %p139 = scmp.eq.s32.totalorder %s21, 3
      %p140 = por %p138, %p139
      %p142 = scmp.ne.s32.totalorder %s125, %s141
      %p143 = scmp.eq.s32.totalorder %s21, 0
      %p144 = por %p142, %p143
      %p145 = scmp.le.s32.totalorder 1, %s15
      %p146 = scmp.lt.s32.totalorder %s15, 5
      %p147 = pnand %p145, %p146
      %p148 = pneg %p147
      // Predicated region
      $region9: #{tpu_custom_call.1} parent=5 // pred_check
        _
      $region10: #{tpu_custom_call.1} parent=5 // pred_check_branch
        %150 = sbr.rel (%p147) target = $region12
      $region11: #{tpu_custom_call.1} parent=5 // pred_region
        %s151 = ssub.s32 %s15, 1
      $region12: #{tpu_custom_call.1} parent=5 // pred_fallthru
        _
      %p152 = scmp.lt.s32.totalorder %s15, 4
      // Predicated region
      $region13: #{tpu_custom_call.1} parent=5 // pred_check
        %p153 = pneg %p152
      $region14: #{tpu_custom_call.1} parent=5 // pred_check_branch
        %155 = sbr.rel (%p153) target = $region16
      $region15: #{tpu_custom_call.1} parent=5 // pred_region
        // Predicated region
        $region17: #{tpu_custom_call.1} parent=15 // pred_check
          %p156 = pneg %p49
        $region18: #{tpu_custom_call.1} parent=15 // pred_check_branch
          %158 = sbr.rel (%p156) target = $region20
        $region19: #{tpu_custom_call.1} parent=15 // pred_region
          %s159 = sand.u32 %s39, 1
          %s160 = scalar_lea.sflag [#allocation3], %s159
          %s161 = sand.u32 %s39, 1
          %s162 = smul.addr %s161, 8
          %s163 = scalar_lea.vmem [#allocation2], %s162
          %s165 = ssub.s32 128, 128
          %166 = vsyncadd %s160, %s165
          %s167 = smul.addr %s22, 4
          %s168 = sadd.s32 %s23, %s167
          %s169 = smul.addr %s168, 128
          %s170 = scalar_lea.hbm %s0, %s169
          %s172 = sshll.u32 %s163, 4
          %s173 = int_to_ptr.vmem [resolvable:$true] %s172
          %175 = dma.hbm_to_vmem [thread:$0]  %s170, 128, %s173, %s160
        $region20: #{tpu_custom_call.1} parent=15 // pred_fallthru
          _
        // Predicated region
        $region21: #{tpu_custom_call.1} parent=15 // pred_check
          %p176 = pneg %p77
        $region22: #{tpu_custom_call.1} parent=15 // pred_check_branch
          %178 = sbr.rel (%p176) target = $region24
        $region23: #{tpu_custom_call.1} parent=15 // pred_region
          %s179 = sand.u32 %s15, 1
          %s180 = scalar_lea.sflag [#allocation5], %s179
          %s181 = sand.u32 %s67, 1
          %s182 = smul.addr %s181, 8
          %s183 = scalar_lea.vmem [#allocation4], %s182
          %s185 = ssub.s32 128, 128
          %186 = vsyncadd %s180, %s185
          %s187 = smul.addr %s22, 4
          %s188 = sadd.s32 %s23, %s187
          %s189 = smul.addr %s188, 128
          %s190 = scalar_lea.hbm %s1, %s189
          %s192 = sshll.u32 %s183, 4
          %s193 = int_to_ptr.vmem [resolvable:$true] %s192
          %195 = dma.hbm_to_vmem [thread:$0]  %s190, 128, %s193, %s180
        $region24: #{tpu_custom_call.1} parent=15 // pred_fallthru
          _
        // Predicated region
        $region25: #{tpu_custom_call.1} parent=15 // pred_check
          %p196 = pneg %p105
        $region26: #{tpu_custom_call.1} parent=15 // pred_check_branch
          %198 = sbr.rel (%p196) target = $region28
        $region27: #{tpu_custom_call.1} parent=15 // pred_region
          %s199 = sand.u32 %s15, 1
          %s200 = scalar_lea.sflag [#allocation5], %s199
          %s201 = sand.u32 %s95, 1
          %s202 = smul.addr %s201, 8
          %s203 = scalar_lea.vmem [#allocation6], %s202
          %s205 = ssub.s32 128, 128
          %206 = vsyncadd %s200, %s205
          %s207 = smul.addr %s22, 4
          %s208 = sadd.s32 %s23, %s207
          %s209 = smul.addr %s208, 128
          %s210 = scalar_lea.hbm %s2, %s209
          %s212 = sshll.u32 %s203, 4
          %s213 = int_to_ptr.vmem [resolvable:$true] %s212
          %215 = dma.hbm_to_vmem [thread:$0]  %s210, 128, %s213, %s200
        $region28: #{tpu_custom_call.1} parent=15 // pred_fallthru
          _
      $region16: #{tpu_custom_call.1} parent=5 // pred_fallthru
        _
      %p216 = scmp.le.s32.totalorder 1, %s15
      %p217 = scmp.lt.s32.totalorder %s15, 5
      %p218 = pnand %p216, %p217
      %p219 = pneg %p218
      // Predicated region
      $region29: #{tpu_custom_call.1} parent=5 // pred_check
        _
      $region30: #{tpu_custom_call.1} parent=5 // pred_check_branch
        %221 = sbr.rel (%p218) target = $region32
      $region31: #{tpu_custom_call.1} parent=5 // pred_region
        %s222 = ssub.s32 %s15, 1
        %s223 = sand.u32 %s42, 1
        %s224 = scalar_lea.sflag [#allocation3], %s223
        %s225 = sand.u32 %s42, 1
        %s226 = smul.addr %s225, 8
        %s227 = scalar_lea.vmem [#allocation2], %s226
        // Predicated region
        $region33: #{tpu_custom_call.1} parent=31 // pred_check
          %p228 = pneg %p55
        $region34: #{tpu_custom_call.1} parent=31 // pred_check_branch
          %230 = sbr.rel (%p228) target = $region36
        $region35: #{tpu_custom_call.1} parent=31 // pred_region
          %231 = dma.done %s224, 128
        $region36: #{tpu_custom_call.1} parent=31 // pred_fallthru
          _
        %s232 = sand.u32 %s20, 1
        %s233 = scalar_lea.sflag [#allocation5], %s232
        %s234 = sand.u32 %s70, 1
        %s235 = smul.addr %s234, 8
        %s236 = scalar_lea.vmem [#allocation4], %s235
        // Predicated region
        $region37: #{tpu_custom_call.1} parent=31 // pred_check
          %p237 = pneg %p83
        $region38: #{tpu_custom_call.1} parent=31 // pred_check_branch
          %239 = sbr.rel (%p237) target = $region40
        $region39: #{tpu_custom_call.1} parent=31 // pred_region
          %240 = dma.done %s233, 128
        $region40: #{tpu_custom_call.1} parent=31 // pred_fallthru
          _
        %s241 = sand.u32 %s20, 1
        %s242 = scalar_lea.sflag [#allocation5], %s241
        %s243 = sand.u32 %s98, 1
        %s244 = smul.addr %s243, 8
        %s245 = scalar_lea.vmem [#allocation6], %s244
        // Predicated region
        $region41: #{tpu_custom_call.1} parent=31 // pred_check
          %p246 = pneg %p111
        $region42: #{tpu_custom_call.1} parent=31 // pred_check_branch
          %248 = sbr.rel (%p246) target = $region44
        $region43: #{tpu_custom_call.1} parent=31 // pred_region
          %249 = dma.done %s242, 128
        $region44: #{tpu_custom_call.1} parent=31 // pred_fallthru
          _
        %s250 = sand.u32 %s42, 1
        %s251 = scalar_lea.sflag [#allocation3], %s250
        %s252 = sand.u32 %s42, 1
        %s253 = smul.addr %s252, 8
        %s254 = scalar_lea.vmem [#allocation2], %s253
        %p255 = pneg %p55
        %p256 = pneg %p52
        %s257 = sand.u32 %s20, 1
        %s258 = scalar_lea.sflag [#allocation5], %s257
        %s259 = sand.u32 %s70, 1
        %s260 = smul.addr %s259, 8
        %s261 = scalar_lea.vmem [#allocation4], %s260
        %p262 = pneg %p83
        %p263 = pneg %p80
        %s264 = sand.u32 %s20, 1
        %s265 = scalar_lea.sflag [#allocation5], %s264
        %s266 = sand.u32 %s98, 1
        %s267 = smul.addr %s266, 8
        %s268 = scalar_lea.vmem [#allocation6], %s267
        %p269 = pneg %p111
        %p270 = pneg %p108
        %p271 = pneg %p137
        %p272 = pneg %p134
        %p273 = scmp.lt.s32.totalorder %s24, 0
        %s274 = scalar_select %p273, %s24, 0
        %s275 = smul.addr %s274, 8
        %s276 = scalar_lea.vmem %s3, %s275
        %p277 = scmp.lt.s32.totalorder %s24, 0
        %s278 = scalar_select %p277, %s24, 0
        %s279 = smul.addr %s278, 8
        %s280 = scalar_lea.vmem %s3, %s279
        %p281 = scmp.eq.s32.totalorder %s25, 0
        // Predicated region
        $region45: #{tpu_custom_call.1} parent=31 // pred_check
          %p282 = pneg %p281
        $region46: #{tpu_custom_call.1} parent=31 // pred_check_branch
          %284 = sbr.rel (%p282) target = $region48
        $region47: #{tpu_custom_call.1} parent=31 // pred_region
          %vm285 = vcmask 7168
          %286 = vst.msk [vmem:[%s280] sm:$0xff] %vm285, 0.0
        $region48: #{tpu_custom_call.1} parent=31 // pred_fallthru
          _
        %v287 = vld [vmem:[%s227] sm:$0xff]
        %v288 = vld [vmem:[%s236] sm:$0xff]
        %v289 = vld [vmem:[%s245] sm:$0xff]
        %v290 = vmax.f32 %v287, 0.0
        %v291 = vmul.f32 %v287, %v288
        %v292 = vsub.f32 %v290, %v291
        %v293 = vand.u32 2147483647, %v287
        %v294 = vsub.f32 0.0, %v293
        %v295 = vmul.f32 %v294, 1.442695
        %v296 = vpow.pop %v295
        %v297 = vadd.f32 %v296, 1.0
        %v298 = vlog2.pop %v297
        %v299 = vmul.f32 %v298, 0.6931472
        %v300 = vmul.f32 -0.5, %v296
        %v301 = vadd.f32 %v300, 1.0
        %v302 = vmul.f32 %v301, %v296
        %v303 = vand.u32 2147483647, %v296
        %vm304 = vcmp.lt.f32.partialorder %v303, 0.0004427343
        %v305 = vsel %vm304, %v302, %v299
        %v306 = vadd.f32 %v292, %v305
        %v307 = vld [vmem:[%s280] sm:$0xff]
        %v308 = vmul.f32 %v289, %v306
        %309 = vadd.xlane.f32.xlu0 %v308
        %v310 = vpop.xlane.xlu0 %309
        %v311 = vadd.f32 %v307, %v310
        %vm312 = vcmask 7168
        %313 = vst.msk [vmem:[%s280] sm:$0xff] %vm312, %v311
        %p314 = scmp.eq.s32.totalorder %s25, 3
        // Predicated region
        $region49: #{tpu_custom_call.1} parent=31 // pred_check
          %p315 = pneg %p314
        $region50: #{tpu_custom_call.1} parent=31 // pred_check_branch
          %317 = sbr.rel (%p315) target = $region52
        $region51: #{tpu_custom_call.1} parent=31 // pred_region
          %v318 = vld [vmem:[%s280] sm:$0xff]
          %v319 = vmul.f32 %v318, 0.001953125
          %320 = vst.msk [vmem:[%s280] sm:$0xff] %vm312, %v319
        $region52: #{tpu_custom_call.1} parent=31 // pred_fallthru
          _
        %p321 = scmp.lt.s32.totalorder %s24, 0
        %s322 = scalar_select %p321, %s24, 0
        %s323 = smul.addr %s322, 8
        %s324 = scalar_lea.vmem %s3, %s323
        // Predicated region
        $region53: #{tpu_custom_call.1} parent=31 // pred_check
          %p325 = pneg %p134
        $region54: #{tpu_custom_call.1} parent=31 // pred_check_branch
          %327 = sbr.rel (%p325) target = $region56
        $region55: #{tpu_custom_call.1} parent=31 // pred_region
          _
        $region56: #{tpu_custom_call.1} parent=31 // pred_fallthru
          _
        // Predicated region
        $region57: #{tpu_custom_call.1} parent=31 // pred_check
          %p328 = pneg %p134
        $region58: #{tpu_custom_call.1} parent=31 // pred_check_branch
          %330 = sbr.rel (%p328) target = $region60
        $region59: #{tpu_custom_call.1} parent=31 // pred_region
          %p331 = scmp.lt.s32.totalorder %s24, 0
          %s332 = scalar_select %p331, %s24, 0
          %s333 = smul.addr %s332, 8
          %s334 = scalar_lea.vmem %s3, %s333
        $region60: #{tpu_custom_call.1} parent=31 // pred_fallthru
          _
      $region32: #{tpu_custom_call.1} parent=5 // pred_fallthru
        _
      %p335 = scmp.le.s32.totalorder 2, %s15
      // Predicated region
      $region61: #{tpu_custom_call.1} parent=5 // pred_check
        %p336 = pneg %p335
      $region62: #{tpu_custom_call.1} parent=5 // pred_check_branch
        %338 = sbr.rel (%p336) target = $region64
      $region63: #{tpu_custom_call.1} parent=5 // pred_region
        %s339 = ssub.s32 %s15, 2
      $region64: #{tpu_custom_call.1} parent=5 // pred_fallthru
        _
    $region6: #{tpu_custom_call.1} parent=1 // loop_footer
      %s19 = sadd.s32 1, %s15
    $region7: #{tpu_custom_call.1} parent=1 // loop_footer_branch
      %14 = sbr.rel target = $region3
    $region8: #{tpu_custom_call.1} parent=1 // loop_exit
      _
    %340 = vsyncpa [#allocation3], 1
    %s341 = scalar_lea.sflag [#allocation3], 1
    %342 = vsyncpa %s341, 1
    %343 = vsyncpa [#allocation5], 1
    %s344 = scalar_lea.sflag [#allocation5], 1
    %345 = vsyncpa %s344, 1

</llo_original>
